<compile_context>
chip_gen: v7x
topology: tpu7x:2x2x1
jax: 0.10.0
libtpu: 0.0.40
codegen_flags: <defaults>
</compile_context>

<pallas_src>
import jax
import jax.numpy as jnp
from jax.experimental import pallas as pl
from jax.experimental.pallas import tpu as pltpu

DIM_H = 128    # fc1 in/out
DIM_2 = 64     # fc2 out (logical width)
DIM_2P = 128   # lane-dense padded fc2 width used inside the kernel
DIM_O = 1      # fc3 out

_MAX_TILE = 4096  # keeps live VMEM (~2 KB/row) inside every chip's scoped default


def _value_mlp_kernel(x_ref, w1_ref, b1_ref, w2_ref, b2_ref, w3_ref, b3_ref, o_ref):
    """Fused 3-layer MLP. fc1/fc2 on the MXU (f32 accumulate), fc3 on the VPU/XLU."""
    # In-kernel cast of the activation stream (no wrapper-side bf16 copy in HBM).
    x = x_ref[...].astype(w1_ref.dtype)                               # (tile, 128)

    h1 = jnp.dot(x, w1_ref[...], preferred_element_type=jnp.float32) + b1_ref[...]
    h1 = jnp.maximum(h1, 0.0).astype(w2_ref.dtype)                    # bf16 for the 2nd MXU pass

    h2 = jnp.dot(h1, w2_ref[...], preferred_element_type=jnp.float32) + b2_ref[...]
    h2 = jnp.maximum(h2, 0.0)                                         # (tile, 128) lane-dense f32

    # fc3 (out width 1): VPU multiply + lane reduction; padded lanes of w3 are zero.
    w3 = w3_ref[...].astype(jnp.float32)                              # (1, 128)
    red = jnp.sum(h2 * w3, axis=-1, keepdims=True)                    # (tile, 1)
    o_ref[...] = (red + b3_ref[...]).astype(o_ref.dtype)


def _round_up(x, m):
    return (x + m - 1) // m * m


def prepare_params(params, compute_dtype=jnp.bfloat16):
    """One-time packing: cast weights, zero-pad fc2/fc3 to 128 lanes, reshape biases.

    Do this at init, not per forward call.
    """
    w1 = jnp.asarray(params["w1"], jnp.float32).astype(compute_dtype)           # (128, 128)
    b1 = jnp.asarray(params["b1"], jnp.float32).reshape(1, DIM_H)               # (1, 128)
    w2 = jnp.pad(jnp.asarray(params["w2"], jnp.float32),
                 ((0, 0), (0, DIM_2P - DIM_2))).astype(compute_dtype)           # (128, 128)
    b2 = jnp.pad(jnp.asarray(params["b2"], jnp.float32).reshape(1, DIM_2),
                 ((0, 0), (0, DIM_2P - DIM_2)))                                 # (1, 128)
    w3 = jnp.pad(jnp.asarray(params["w3"], jnp.float32).reshape(1, DIM_2),
                 ((0, 0), (0, DIM_2P - DIM_2))).astype(compute_dtype)           # (1, 128)
    b3 = jnp.asarray(params["b3"], jnp.float32).reshape(1, 1)                   # (1, 1)
    return dict(w1=w1, b1=b1, w2=w2, b2=b2, w3=w3, b3=b3)


def state_value_network(state, prep, *, batch_tile=2048, min_grid_steps=1):
    """state: (B, 128). prep: output of prepare_params().

    batch_tile: rows per grid step (amortizes ~0.35us/step pipeline overhead).
    min_grid_steps: set to 2 on v7x so the "parallel" batch axis shards across
    both TensorCores for mid-size batches; leave 1 on single-TC v5e/v6e.
    """
    B, D = state.shape
    assert D == DIM_H

    batch_tile = min(max(8, _round_up(batch_tile, 8)), _MAX_TILE)
    # Single tile for B <= batch_tile; otherwise batch_tile-row tiles with a
    # (masked) partial trailing block. tile is either == B (full dim) or a
    # multiple of 8, so the (8,128) BlockSpec constraint always holds.
    tile = min(batch_tile, B)
    if min_grid_steps > 1 and B >= 16:
        tile = min(tile, _round_up(pl.cdiv(B, min_grid_steps), 8))
    num_tiles = pl.cdiv(B, tile)

    in_specs = [
        # activations: tiled over the batch axis, streamed in the caller's dtype
        pl.BlockSpec((tile, DIM_H), lambda i: (i, 0)),
        # weights / biases: full blocks, constant index_map -> resident, DMA'd once
        pl.BlockSpec((DIM_H, DIM_H), lambda i: (0, 0)),
        pl.BlockSpec((1, DIM_H), lambda i: (0, 0)),
        pl.BlockSpec((DIM_H, DIM_2P), lambda i: (0, 0)),
        pl.BlockSpec((1, DIM_2P), lambda i: (0, 0)),
        pl.BlockSpec((1, DIM_2P), lambda i: (0, 0)),
        pl.BlockSpec((1, 1), lambda i: (0, 0)),
    ]
    out_spec = pl.BlockSpec((tile, DIM_O), lambda i: (i, 0))

    return pl.pallas_call(
        _value_mlp_kernel,
        out_shape=jax.ShapeDtypeStruct((B, DIM_O), jnp.float32),
        grid_spec=pltpu.PrefetchScalarGridSpec(
            num_scalar_prefetch=0,
            grid=(num_tiles,),
            in_specs=in_specs,
            out_specs=out_spec,
        ),
        compiler_params=pltpu.CompilerParams(
            dimension_semantics=("parallel",),
        ),
    )(state, prep["w1"], prep["b1"], prep["w2"], prep["b2"], prep["w3"], prep["b3"])


def init_params(key):
    """Deterministic init mimicking PyTorch Linear default: U(-1/sqrt(fan_in), 1/sqrt(fan_in))."""
    ks = jax.random.split(key, 6)

    def lin(kw, kb, fan_in, fan_out):
        bound = 1.0 / jnp.sqrt(fan_in)
        w = jax.random.uniform(kw, (fan_in, fan_out), jnp.float32, -bound, bound)
        b = jax.random.uniform(kb, (1, fan_out), jnp.float32, -bound, bound)
        return w, b

    w1, b1 = lin(ks[0], ks[1], DIM_H, DIM_H)
    w2, b2 = lin(ks[2], ks[3], DIM_H, DIM_2)
    w3, b3 = lin(ks[4], ks[5], DIM_2, DIM_O)
    return dict(w1=w1, b1=b1, w2=w2, b2=b2, w3=w3, b3=b3)


if __name__ == "__main__":
    key = jax.random.PRNGKey(0)
    kp, kx = jax.random.split(key)

    raw_params = init_params(kp)
    prep = prepare_params(raw_params)          # one-time weight packing

    B = 20  # small, non-multiple-of-8 batch
    state = jax.random.normal(kx, (B, DIM_H), jnp.float32)

    # Default path: single tile (B <= batch_tile).
    out = jax.block_until_ready(state_value_network(state, prep))
    # Multi-step path: exercises a multiple-of-8 tile with a masked partial last block.
    out_tiled = jax.block_until_ready(state_value_network(state, prep, batch_tile=8))
    # v7x-style path: at least 2 parallel grid steps.
    out_split = jax.block_until_ready(state_value_network(state, prep, min_grid_steps=2))

    assert out.shape == (B, DIM_O)

    # Pure-JAX reference applying the same bf16-stream / f32-accumulate math.
    def bf(a):
        return a.astype(jnp.bfloat16).astype(jnp.float32)

    hi = jax.lax.Precision.HIGHEST
    h1 = jnp.maximum(
        jnp.dot(bf(state), bf(raw_params["w1"]), precision=hi) + raw_params["b1"], 0.0)
    h1 = bf(h1)
    h2 = jnp.maximum(
        jnp.dot(h1, bf(raw_params["w2"]), precision=hi) + raw_params["b2"], 0.0)
    ref = (jnp.sum(h2 * bf(raw_params["w3"]).reshape(1, DIM_2), axis=-1, keepdims=True)
           + raw_params["b3"].reshape(1, 1))

    for got in (out, out_tiled, out_split):
        assert jnp.allclose(got, ref, atol=2e-3, rtol=2e-3), float(jnp.max(jnp.abs(got - ref)))

    print("KERNEL_OK")
</pallas_src>

<mosaic_0001>
module attributes {stable_mosaic.version = 11 : i64} {
  func.func @_value_mlp_kernel(%arg0: i32, %arg1: memref<20x128xf32, #tpu.memory_space<vmem>>, %arg2: memref<128x128xbf16, #tpu.memory_space<vmem>>, %arg3: memref<1x128xf32, #tpu.memory_space<vmem>>, %arg4: memref<128x128xbf16, #tpu.memory_space<vmem>>, %arg5: memref<1x128xf32, #tpu.memory_space<vmem>>, %arg6: memref<1x128xbf16, #tpu.memory_space<vmem>>, %arg7: memref<1x1xf32, #tpu.memory_space<vmem>>, %arg8: memref<20x1xf32, #tpu.memory_space<vmem>>) attributes {dimension_semantics = [#tpu.dimension_semantics<parallel>], iteration_bounds = array<i64: 1>, scalar_prefetch = 0 : i64, scratch_operands = 0 : i64, tpu.core_type = #tpu.core_type<tc>, window_params = [{transform_indices = @transform_0, window_bounds = array<i64: 20, 128>}, {pipeline_mode = #tpu.pipeline_mode<synchronous>, transform_indices = @transform_1, window_bounds = array<i64: 128, 128>}, {pipeline_mode = #tpu.pipeline_mode<synchronous>, transform_indices = @transform_2, window_bounds = array<i64: 1, 128>}, {pipeline_mode = #tpu.pipeline_mode<synchronous>, transform_indices = @transform_3, window_bounds = array<i64: 128, 128>}, {pipeline_mode = #tpu.pipeline_mode<synchronous>, transform_indices = @transform_4, window_bounds = array<i64: 1, 128>}, {pipeline_mode = #tpu.pipeline_mode<synchronous>, transform_indices = @transform_5, window_bounds = array<i64: 1, 128>}, {pipeline_mode = #tpu.pipeline_mode<synchronous>, transform_indices = @transform_6, window_bounds = array<i64: 1, 1>}, {transform_indices = @transform_7, window_bounds = array<i64: 20, 1>}]} {
    %c0 = arith.constant 0 : index
    %c0_0 = arith.constant 0 : index
    %0 = vector.load %arg1[%c0, %c0_0] : memref<20x128xf32, #tpu.memory_space<vmem>>, vector<20x128xf32>
    %1 = arith.truncf %0 : vector<20x128xf32> to vector<20x128xbf16>
    %c0_1 = arith.constant 0 : index
    %c0_2 = arith.constant 0 : index
    %2 = vector.load %arg2[%c0_1, %c0_2] : memref<128x128xbf16, #tpu.memory_space<vmem>>, vector<128x128xbf16>
    %cst = arith.constant dense<0.000000e+00> : vector<20x128xf32>
    %3 = tpu.matmul %1, %2, %cst {dimension_numbers = #tpu.dot_dimension_numbers<[1], [0], [0], [1], [0, 0, 1, 1], [], []>} : vector<20x128xbf16>, vector<128x128xbf16>, vector<20x128xf32> -> vector<20x128xf32>
    %c0_3 = arith.constant 0 : index
    %c0_4 = arith.constant 0 : index
    %4 = vector.load %arg3[%c0_3, %c0_4] : memref<1x128xf32, #tpu.memory_space<vmem>>, vector<1x128xf32>
    %5 = vector.broadcast %4 : vector<1x128xf32> to vector<20x128xf32>
    %6 = arith.addf %3, %5 : vector<20x128xf32>
    %cst_5 = arith.constant 0.000000e+00 : f32
    %7 = vector.broadcast %cst_5 : f32 to vector<20x128xf32>
    %8 = arith.maximumf %6, %7 : vector<20x128xf32>
    %9 = arith.truncf %8 : vector<20x128xf32> to vector<20x128xbf16>
    %c0_6 = arith.constant 0 : index
    %c0_7 = arith.constant 0 : index
    %10 = vector.load %arg4[%c0_6, %c0_7] : memref<128x128xbf16, #tpu.memory_space<vmem>>, vector<128x128xbf16>
    %cst_8 = arith.constant dense<0.000000e+00> : vector<20x128xf32>
    %11 = tpu.matmul %9, %10, %cst_8 {dimension_numbers = #tpu.dot_dimension_numbers<[1], [0], [0], [1], [0, 0, 1, 1], [], []>} : vector<20x128xbf16>, vector<128x128xbf16>, vector<20x128xf32> -> vector<20x128xf32>
    %c0_9 = arith.constant 0 : index
    %c0_10 = arith.constant 0 : index
    %12 = vector.load %arg5[%c0_9, %c0_10] : memref<1x128xf32, #tpu.memory_space<vmem>>, vector<1x128xf32>
    %13 = vector.broadcast %12 : vector<1x128xf32> to vector<20x128xf32>
    %14 = arith.addf %11, %13 : vector<20x128xf32>
    %cst_11 = arith.constant 0.000000e+00 : f32
    %15 = vector.broadcast %cst_11 : f32 to vector<20x128xf32>
    %16 = arith.maximumf %14, %15 : vector<20x128xf32>
    %c0_12 = arith.constant 0 : index
    %c0_13 = arith.constant 0 : index
    %17 = vector.load %arg6[%c0_12, %c0_13] : memref<1x128xbf16, #tpu.memory_space<vmem>>, vector<1x128xbf16>
    %18 = arith.extf %17 : vector<1x128xbf16> to vector<1x128xf32>
    %19 = vector.broadcast %18 : vector<1x128xf32> to vector<20x128xf32>
    %20 = arith.mulf %16, %19 : vector<20x128xf32>
    %cst_14 = arith.constant dense<0.000000e+00> : vector<20xf32>
    %21 = vector.multi_reduction <add>, %20, %cst_14 [1] : vector<20x128xf32> to vector<20xf32>
    %22 = vector.shape_cast %21 : vector<20xf32> to vector<20x1xf32>
    %c0_15 = arith.constant 0 : index
    %c0_16 = arith.constant 0 : index
    %23 = vector.load %arg7[%c0_15, %c0_16] : memref<1x1xf32, #tpu.memory_space<vmem>>, vector<1x1xf32>
    %24 = vector.broadcast %23 : vector<1x1xf32> to vector<20x1xf32>
    %25 = arith.addf %22, %24 : vector<20x1xf32>
    %c0_17 = arith.constant 0 : index
    %c0_18 = arith.constant 0 : index
    %26 = vector.load %arg8[%c0_17, %c0_18] : memref<20x1xf32, #tpu.memory_space<vmem>>, vector<20x1xf32>
    tpu.vector_store %arg8[%c0_17, %c0_18], %25 {strides = array<i32>} : memref<20x1xf32, #tpu.memory_space<vmem>>, vector<20x1xf32>,
    return
  }
  func.func @transform_0(%arg0: i32) -> (i32, i32) {
    %c0_i32 = arith.constant 0 : i32
    %c0_i32_0 = arith.constant 0 : i32
    return %arg0, %c0_i32 : i32, i32
  }
  func.func @transform_1(%arg0: i32) -> (i32, i32) {
    %c0_i32 = arith.constant 0 : i32
    %c0_i32_0 = arith.constant 0 : i32
    %c0_i32_1 = arith.constant 0 : i32
    return %c0_i32, %c0_i32_0 : i32, i32
  }
  func.func @transform_2(%arg0: i32) -> (i32, i32) {
    %c0_i32 = arith.constant 0 : i32
    %c0_i32_0 = arith.constant 0 : i32
    %c0_i32_1 = arith.constant 0 : i32
    return %c0_i32, %c0_i32_0 : i32, i32
  }
  func.func @transform_3(%arg0: i32) -> (i32, i32) {
    %c0_i32 = arith.constant 0 : i32
    %c0_i32_0 = arith.constant 0 : i32
    %c0_i32_1 = arith.constant 0 : i32
    return %c0_i32, %c0_i32_0 : i32, i32
  }
  func.func @transform_4(%arg0: i32) -> (i32, i32) {
    %c0_i32 = arith.constant 0 : i32
    %c0_i32_0 = arith.constant 0 : i32
    %c0_i32_1 = arith.constant 0 : i32
    return %c0_i32, %c0_i32_0 : i32, i32
  }
  func.func @transform_5(%arg0: i32) -> (i32, i32) {
    %c0_i32 = arith.constant 0 : i32
    %c0_i32_0 = arith.constant 0 : i32
    %c0_i32_1 = arith.constant 0 : i32
    return %c0_i32, %c0_i32_0 : i32, i32
  }
  func.func @transform_6(%arg0: i32) -> (i32, i32) {
    %c0_i32 = arith.constant 0 : i32
    %c0_i32_0 = arith.constant 0 : i32
    %c0_i32_1 = arith.constant 0 : i32
    return %c0_i32, %c0_i32_0 : i32, i32
  }
  func.func @transform_7(%arg0: i32) -> (i32, i32) {
    %c0_i32 = arith.constant 0 : i32
    %c0_i32_0 = arith.constant 0 : i32
    return %arg0, %c0_i32 : i32, i32
  }
}

</mosaic_0001>

<llo_original>
// kernel: tpu_custom_call.1
$region0: #{tpu_custom_call.1}
  #allocation0 [shape = 'u32[]', space=smem, size = 0x4, offset = 0x4, fixed_abs, tag = 'smem constant byte address 0x4 - core index']
  #allocation1 [shape = 'u32[144,128]{1,0:T(1,128)}', space=vmem, size = 0x12000, scoped, tag = 'internal scratch']
  #allocation2 [shape = 'f32[1,1]{1,0:T(1,128)S(1)}', space=vmem, size = 0x200, scoped, tag = 'scoped memory for tpu_custom_call.1']
  %s0 = inlined_call_operand.hbm [shape: f32[20,128], index: 0, kind: input, shape index: {}]
  %s1 = inlined_call_operand.hbm [shape: bf16[128,128], index: 1, kind: input, shape index: {}]
  %s2 = inlined_call_operand.vmem [shape: f32[1,128], index: 2, kind: input, shape index: {}]
  %s3 = inlined_call_operand.hbm [shape: bf16[128,128], index: 3, kind: input, shape index: {}]
  %s4 = inlined_call_operand.vmem [shape: f32[1,128], index: 4, kind: input, shape index: {}]
  %s5 = inlined_call_operand.vmem [shape: bf16[1,128], index: 5, kind: input, shape index: {}]
  %s6 = inlined_call_operand.<no memory space> [shape: f32[1,1], index: 6, kind: input, shape index: {}]
  %s7 = inlined_call_operand.vmem [shape: f32[20,1], index: 7, kind: output, shape index: {}]
  %s8 = sld [smem:[#allocation0]]
  $region50: #{tpu_custom_call.1} parent=0
    _
  %s10 = ssub.s32 1, %s8
  %s11 = scalar_select 0, %s10, %s8
  %v12 = vstv %s6
  %13 = vst [vmem:[#allocation2] sm:$0x1] %v12
  $region1: #{tpu_custom_call.1} parent=0
    #allocation3 [shape = 'u8[12288]{0}', space=vmem, size = 0x3000, scoped, tag = 'input window, operand 0, single buffered']
    #allocation4 [shape = 's32[1]{0}', space=sflag, size = 0x4, scoped, tag = 'scoped memory for tpu_custom_call.1']
    #allocation5 [shape = 'u8[32768]{0}', space=vmem, size = 0x8000, scoped, tag = 'input window, operand 1, single buffered']
    #allocation6 [shape = 's32[1]{0}', space=sflag, size = 0x4, scoped, tag = 'scoped memory for tpu_custom_call.1']
    #allocation7 [shape = 'u8[32768]{0}', space=vmem, size = 0x8000, scoped, tag = 'input window, operand 3, single buffered']
    %14 = vsyncpa [#allocation4], 0
    %15 = vsyncpa [#allocation6], 0
    // Predicated region
    $region2: #{tpu_custom_call.1} parent=1 // pred_check
      _
    $region3: #{tpu_custom_call.1} parent=1 // pred_check_branch
      %17 = sbr.rel (0) target = $region5
    $region4: #{tpu_custom_call.1} parent=1 // pred_region
      %s19 = ssub.s32 384, 384
      %20 = vsyncadd [#allocation4], %s19
      %s21 = sshll.u32 [#allocation3], 4
      %s22 = int_to_ptr.vmem [resolvable:$true] %s21
      %27 = dma.hbm_to_vmem [thread:$0]  %s0, 384, %s22, [#allocation4], 128, 128, 8
    $region5: #{tpu_custom_call.1} parent=1 // pred_fallthru
      _
    // Predicated region
    $region6: #{tpu_custom_call.1} parent=1 // pred_check
      _
    $region7: #{tpu_custom_call.1} parent=1 // pred_check_branch
      %29 = sbr.rel (0) target = $region9
    $region8: #{tpu_custom_call.1} parent=1 // pred_region
      %s31 = ssub.s32 1024, 1024
      %32 = vsyncadd [#allocation6], %s31
      %s33 = sshll.u32 [#allocation5], 4
      %s34 = int_to_ptr.vmem [resolvable:$true] %s33
      %39 = dma.hbm_to_vmem [thread:$0]  %s1, 1024, %s34, [#allocation6], 64, 64, 4
    $region9: #{tpu_custom_call.1} parent=1 // pred_fallthru
      _
    // Predicated region
    $region10: #{tpu_custom_call.1} parent=1 // pred_check
      _
    $region11: #{tpu_custom_call.1} parent=1 // pred_check_branch
      %41 = sbr.rel (0) target = $region13
    $region12: #{tpu_custom_call.1} parent=1 // pred_region
      _
    $region13: #{tpu_custom_call.1} parent=1 // pred_fallthru
      _
    // Predicated region
    $region14: #{tpu_custom_call.1} parent=1 // pred_check
      _
    $region15: #{tpu_custom_call.1} parent=1 // pred_check_branch
      %43 = sbr.rel (0) target = $region17
    $region16: #{tpu_custom_call.1} parent=1 // pred_region
      %s45 = ssub.s32 1024, 1024
      %46 = vsyncadd [#allocation6], %s45
      %s47 = sshll.u32 [#allocation7], 4
      %s48 = int_to_ptr.vmem [resolvable:$true] %s47
      %53 = dma.hbm_to_vmem [thread:$0]  %s3, 1024, %s48, [#allocation6], 64, 64, 4
    $region17: #{tpu_custom_call.1} parent=1 // pred_fallthru
      _
    // Predicated region
    $region18: #{tpu_custom_call.1} parent=1 // pred_check
      _
    $region19: #{tpu_custom_call.1} parent=1 // pred_check_branch
      %55 = sbr.rel (0) target = $region21
    $region20: #{tpu_custom_call.1} parent=1 // pred_region
      _
    $region21: #{tpu_custom_call.1} parent=1 // pred_fallthru
      _
    // Predicated region
    $region22: #{tpu_custom_call.1} parent=1 // pred_check
      _
    $region23: #{tpu_custom_call.1} parent=1 // pred_check_branch
      %57 = sbr.rel (0) target = $region25
    $region24: #{tpu_custom_call.1} parent=1 // pred_region
      _
    $region25: #{tpu_custom_call.1} parent=1 // pred_fallthru
      _
    // Predicated region
    $region26: #{tpu_custom_call.1} parent=1 // pred_check
      _
    $region27: #{tpu_custom_call.1} parent=1 // pred_check_branch
      %59 = sbr.rel (0) target = $region29
    $region28: #{tpu_custom_call.1} parent=1 // pred_region
      _
    $region29: #{tpu_custom_call.1} parent=1 // pred_fallthru
      _
    // Predicated region
    $region30: #{tpu_custom_call.1} parent=1 // pred_check
      _
    $region31: #{tpu_custom_call.1} parent=1 // pred_check_branch
      %61 = sbr.rel (0) target = $region33
    $region32: #{tpu_custom_call.1} parent=1 // pred_region
      %62 = dma.done [#allocation4], 384
    $region33: #{tpu_custom_call.1} parent=1 // pred_fallthru
      _
    // Predicated region
    $region34: #{tpu_custom_call.1} parent=1 // pred_check
      _
    $region35: #{tpu_custom_call.1} parent=1 // pred_check_branch
      %64 = sbr.rel (0) target = $region37
    $region36: #{tpu_custom_call.1} parent=1 // pred_region
      %65 = dma.done [#allocation6], 1024
    $region37: #{tpu_custom_call.1} parent=1 // pred_fallthru
      _
    // Predicated region
    $region38: #{tpu_custom_call.1} parent=1 // pred_check
      _
    $region39: #{tpu_custom_call.1} parent=1 // pred_check_branch
      %67 = sbr.rel (0) target = $region41
    $region40: #{tpu_custom_call.1} parent=1 // pred_region
      %68 = dma.done [#allocation6], 1024
    $region41: #{tpu_custom_call.1} parent=1 // pred_fallthru
      _
    %v70 = vld [vmem:[#allocation3] sm:$0xff]
    %v71 = vld [vmem:[#allocation3 + $0x8] sm:$0xff]
    %v72 = vld [vmem:[#allocation3 + $0x10] sm:$0xf]
    %v73 = vpack.c.bf16 %v71, %v70
    %v74 = vpack.c.bf16 %v72, %v72
    %v75 = vld [vmem:[#allocation5] sm:$0xf]
    %v76 = vld [vmem:[#allocation5 + $0x4] sm:$0xf]
    %v77 = vld [vmem:[#allocation5 + $0x8] sm:$0xf]
    %v78 = vld [vmem:[#allocation5 + $0xc] sm:$0xf]
    %v79 = vld [vmem:[#allocation5 + $0x10] sm:$0xf]
    %v80 = vld [vmem:[#allocation5 + $0x14] sm:$0xf]
    %v81 = vld [vmem:[#allocation5 + $0x18] sm:$0xf]
    %v82 = vld [vmem:[#allocation5 + $0x1c] sm:$0xf]
    %v83 = vld [vmem:[#allocation5 + $0x20] sm:$0xf]
    %v84 = vld [vmem:[#allocation5 + $0x24] sm:$0xf]
    %v85 = vld [vmem:[#allocation5 + $0x28] sm:$0xf]
    %v86 = vld [vmem:[#allocation5 + $0x2c] sm:$0xf]
    %v87 = vld [vmem:[#allocation5 + $0x30] sm:$0xf]
    %v88 = vld [vmem:[#allocation5 + $0x34] sm:$0xf]
    %v89 = vld [vmem:[#allocation5 + $0x38] sm:$0xf]
    %v90 = vld [vmem:[#allocation5 + $0x3c] sm:$0xf]
    %v91 = vld [vmem:[%s2] sm:$0x1]
    %v93 = vlaneseq
    %v94 = vshrl.u32 %v93, 7
    %v95 = vsub.s32 0, %v94
    %v96 = vrot.slane %v91, %v95
    %v114 = vunpack.c.l.b16 %v75
    %v115 = vunpack.c.l.b16 %v76
    %v116 = vunpack.c.l.b16 %v77
    %v117 = vunpack.c.l.b16 %v78
    %v118 = vunpack.c.l.b16 %v79
    %v119 = vunpack.c.l.b16 %v80
    %v120 = vunpack.c.l.b16 %v81
    %v121 = vunpack.c.l.b16 %v82
    %v122 = vunpack.c.l.b16 %v83
    %v123 = vunpack.c.l.b16 %v84
    %v124 = vunpack.c.l.b16 %v85
    %v125 = vunpack.c.l.b16 %v86
    %v126 = vunpack.c.l.b16 %v87
    %v127 = vunpack.c.l.b16 %v88
    %v128 = vunpack.c.l.b16 %v89
    %v129 = vunpack.c.l.b16 %v90
    %v130 = vpack.c.b16 %v115, %v114
    %v131 = vpack.c.b16 %v117, %v116
    %v132 = vpack.c.b16 %v119, %v118
    %v133 = vpack.c.b16 %v121, %v120
    %v134 = vpack.c.b16 %v123, %v122
    %v135 = vpack.c.b16 %v125, %v124
    %v136 = vpack.c.b16 %v127, %v126
    %v137 = vpack.c.b16 %v129, %v128
    %146 = vmatprep.subr.bf16.mxu0 0
    %147 = vmatpush1.bf16.msra.mxu0 %v130
    %148 = vmatprep.subr.bf16.mxu0 0
    %149 = vmatpush1.bf16.msra.mxu0 %v131
    %150 = vmatprep.subr.bf16.mxu0 0
    %151 = vmatpush1.bf16.msra.mxu0 %v132
    %152 = vmatprep.subr.bf16.mxu0 0
    %153 = vmatpush1.bf16.msra.mxu0 %v133
    %154 = vmatprep.subr.bf16.mxu0 0
    %155 = vmatpush1.bf16.msra.mxu0 %v134
    %156 = vmatprep.subr.bf16.mxu0 0
    %157 = vmatpush1.bf16.msra.mxu0 %v135
    %158 = vmatprep.subr.bf16.mxu0 0
    %159 = vmatpush1.bf16.msra.mxu0 %v136
    %160 = vmatprep.subr.bf16.mxu0 0
    %161 = vmatpush1.bf16.msra.mxu0 %v137
    %162 = vmatprep.subr.bf16.mxu0 0
    %163 = vmatpush1.bf16.msra.mxu0 0
    %164 = vmatprep.subr.bf16.mxu0 0
    %165 = vmatpush1.bf16.msra.mxu0 0
    %166 = vmatprep.subr.bf16.mxu0 0
    %167 = vmatpush1.bf16.msra.mxu0 0
    %168 = vmatprep.subr.bf16.mxu0 0
    %169 = vmatpush1.bf16.msra.mxu0 0
    %170 = vmatprep.subr.bf16.mxu0 0
    %171 = vmatpush1.bf16.msra.mxu0 0
    %172 = vmatprep.subr.bf16.mxu0 0
    %173 = vmatpush1.bf16.msra.mxu0 0
    %174 = vmatprep.subr.bf16.mxu0 0
    %175 = vmatpush1.bf16.msra.mxu0 0
    %176 = vmatprep.subr.bf16.mxu0 0
    %177 = vmatpush1.bf16.msra.mxu0 0
    %178 = vmatprep.mubr.bf16.mxu0 0
    %179 = vmatmul.mubr.bf16.gmra.mrb[0].mxu0 %v73
    %v180 = vpop.f32.mrb[0].mxu0
    %v181 = vadd.f32 %v96, %v180
    %v182 = vpop.f32.mrb[0].mxu0
    %v183 = vpop.f32.mrb[0].mxu0
    %v184 = vadd.f32 %v96, %v183
    %v185 = vpop.f32.mrb[0].mxu0
    %186 = vmatprep.mubr.bf16.mxu0 0
    %187 = vmatmul.mubr.bf16.gmra.mrb[0].mxu0 %v74
    %v188 = vpop.f32.mrb[0].mxu0
    %v189 = vadd.f32 %v96, %v188
    %v190 = vpop.f32.mrb[0].mxu0
    %v191 = vpop.f32.mrb[0].mxu0
    %v192 = vpop.f32.mrb[0].mxu0
    %193 = vdwg.mxu0
    %v194 = vmax.f32 %v181, 0.0
    %v195 = vmax.f32 %v184, 0.0
    %v196 = vmax.f32 %v189, 0.0
    %v197 = vpack.c.bf16 %v195, %v194
    %v198 = vpack.c.bf16 %v196, %v196
    %v199 = vld [vmem:[#allocation7] sm:$0xf]
    %v200 = vld [vmem:[#allocation7 + $0x4] sm:$0xf]
    %v201 = vld [vmem:[#allocation7 + $0x8] sm:$0xf]
    %v202 = vld [vmem:[#allocation7 + $0xc] sm:$0xf]
    %v203 = vld [vmem:[#allocation7 + $0x10] sm:$0xf]
    %v204 = vld [vmem:[#allocation7 + $0x14] sm:$0xf]
    %v205 = vld [vmem:[#allocation7 + $0x18] sm:$0xf]
    %v206 = vld [vmem:[#allocation7 + $0x1c] sm:$0xf]
    %v207 = vld [vmem:[#allocation7 + $0x20] sm:$0xf]
    %v208 = vld [vmem:[#allocation7 + $0x24] sm:$0xf]
    %v209 = vld [vmem:[#allocation7 + $0x28] sm:$0xf]
    %v210 = vld [vmem:[#allocation7 + $0x2c] sm:$0xf]
    %v211 = vld [vmem:[#allocation7 + $0x30] sm:$0xf]
    %v212 = vld [vmem:[#allocation7 + $0x34] sm:$0xf]
    %v213 = vld [vmem:[#allocation7 + $0x38] sm:$0xf]
    %v214 = vld [vmem:[#allocation7 + $0x3c] sm:$0xf]
    %v215 = vld [vmem:[%s4] sm:$0x1]
    %v217 = vlaneseq
    %v218 = vshrl.u32 %v217, 7
    %v219 = vsub.s32 0, %v218
    %v220 = vrot.slane %v215, %v219
    %v238 = vunpack.c.l.b16 %v199
    %v239 = vunpack.c.l.b16 %v200
    %v240 = vunpack.c.l.b16 %v201
    %v241 = vunpack.c.l.b16 %v202
    %v242 = vunpack.c.l.b16 %v203
    %v243 = vunpack.c.l.b16 %v204
    %v244 = vunpack.c.l.b16 %v205
    %v245 = vunpack.c.l.b16 %v206
    %v246 = vunpack.c.l.b16 %v207
    %v247 = vunpack.c.l.b16 %v208
    %v248 = vunpack.c.l.b16 %v209
    %v249 = vunpack.c.l.b16 %v210
    %v250 = vunpack.c.l.b16 %v211
    %v251 = vunpack.c.l.b16 %v212
    %v252 = vunpack.c.l.b16 %v213
    %v253 = vunpack.c.l.b16 %v214
    %v254 = vpack.c.b16 %v239, %v238
    %v255 = vpack.c.b16 %v241, %v240
    %v256 = vpack.c.b16 %v243, %v242
    %v257 = vpack.c.b16 %v245, %v244
    %v258 = vpack.c.b16 %v247, %v246
    %v259 = vpack.c.b16 %v249, %v248
    %v260 = vpack.c.b16 %v251, %v250
    %v261 = vpack.c.b16 %v253, %v252
    %270 = vmatprep.subr.bf16.mxu0 0
    %271 = vmatpush1.bf16.msra.mxu0 %v254
    %272 = vmatprep.subr.bf16.mxu0 0
    %273 = vmatpush1.bf16.msra.mxu0 %v255
    %274 = vmatprep.subr.bf16.mxu0 0
    %275 = vmatpush1.bf16.msra.mxu0 %v256
    %276 = vmatprep.subr.bf16.mxu0 0
    %277 = vmatpush1.bf16.msra.mxu0 %v257
    %278 = vmatprep.subr.bf16.mxu0 0
    %279 = vmatpush1.bf16.msra.mxu0 %v258
    %280 = vmatprep.subr.bf16.mxu0 0
    %281 = vmatpush1.bf16.msra.mxu0 %v259
    %282 = vmatprep.subr.bf16.mxu0 0
    %283 = vmatpush1.bf16.msra.mxu0 %v260
    %284 = vmatprep.subr.bf16.mxu0 0
    %285 = vmatpush1.bf16.msra.mxu0 %v261
    %286 = vmatprep.subr.bf16.mxu0 0
    %287 = vmatpush1.bf16.msra.mxu0 0
    %288 = vmatprep.subr.bf16.mxu0 0
    %289 = vmatpush1.bf16.msra.mxu0 0
    %290 = vmatprep.subr.bf16.mxu0 0
    %291 = vmatpush1.bf16.msra.mxu0 0
    %292 = vmatprep.subr.bf16.mxu0 0
    %293 = vmatpush1.bf16.msra.mxu0 0
    %294 = vmatprep.subr.bf16.mxu0 0
    %295 = vmatpush1.bf16.msra.mxu0 0
    %296 = vmatprep.subr.bf16.mxu0 0
    %297 = vmatpush1.bf16.msra.mxu0 0
    %298 = vmatprep.subr.bf16.mxu0 0
    %299 = vmatpush1.bf16.msra.mxu0 0
    %300 = vmatprep.subr.bf16.mxu0 0
    %301 = vmatpush1.bf16.msra.mxu0 0
    %302 = vmatprep.mubr.bf16.mxu0 0
    %303 = vmatmul.mubr.bf16.gmra.mrb[0].mxu0 %v197
    %v304 = vpop.f32.mrb[0].mxu0
    %v305 = vadd.f32 %v220, %v304
    %v306 = vpop.f32.mrb[0].mxu0
    %v307 = vpop.f32.mrb[0].mxu0
    %v308 = vadd.f32 %v220, %v307
    %v309 = vpop.f32.mrb[0].mxu0
    %310 = vmatprep.mubr.bf16.mxu0 0
    %311 = vmatmul.mubr.bf16.gmra.mrb[0].mxu0 %v198
    %v312 = vpop.f32.mrb[0].mxu0
    %v313 = vadd.f32 %v220, %v312
    %v314 = vpop.f32.mrb[0].mxu0
    %v315 = vpop.f32.mrb[0].mxu0
    %v316 = vpop.f32.mrb[0].mxu0
    %317 = vdwg.mxu0
    %v318 = vmax.f32 %v305, 0.0
    %v319 = vmax.f32 %v308, 0.0
    %v320 = vmax.f32 %v313, 0.0
    %v321 = vld [vmem:[%s5] sm:$0x1]
    %v322 = vunpack.c.l.bf16 %v321
    %v323 = vlaneseq
    %v324 = vshrl.u32 %v323, 7
    %v325 = vsub.s32 0, %v324
    %v326 = vrot.slane %v322, %v325
    %v327 = vmul.f32 %v318, %v326
    %v328 = vmul.f32 %v319, %v326
    %v329 = vmul.f32 %v320, %v326
    %330 = vadd.xlane.f32.xlu0 %v327
    %v331 = vpop.xlane.xlu0 %330
    %332 = vadd.xlane.f32.xlu0 %v328
    %v333 = vpop.xlane.xlu0 %332
    %vm334 = vcmask 1043456
    %v335 = vsel %vm334, %v329, 0.0
    %336 = vadd.xlane.f32.xlu0 %v335
    %v337 = vpop.xlane.xlu0 %336
    %v338 = vld [vmem:[#allocation2] sm:$0x1]
    %v340 = vlaneseq
    %v341 = vshrl.u32 %v340, 7
    %v342 = vsub.s32 0, %v341
    %v343 = vrot.slane %v338, %v342
    %v345 = vadd.f32 %v331, %v343
    %v346 = vadd.f32 %v333, %v343
    %v347 = vadd.f32 %v337, %v343
    %vm348 = vcmask 7168
    %349 = vst.msk [vmem:[%s7] sm:$0xff] %vm348, %v345
    %350 = vst.msk [vmem:[%s7 + $0x8] sm:$0xff] %vm348, %v346
    %vm351 = vcmask 3072
    %352 = vst.msk [vmem:[%s7 + $0x10] sm:$0xf] %vm351, %v347
    // Predicated region
    $region42: #{tpu_custom_call.1} parent=1 // pred_check
      _
    $region43: #{tpu_custom_call.1} parent=1 // pred_check_branch
      %354 = sbr.rel (0) target = $region45
    $region44: #{tpu_custom_call.1} parent=1 // pred_region
      _
    $region45: #{tpu_custom_call.1} parent=1 // pred_fallthru
      _
    // Predicated region
    $region46: #{tpu_custom_call.1} parent=1 // pred_check
      _
    $region47: #{tpu_custom_call.1} parent=1 // pred_check_branch
      %356 = sbr.rel (0) target = $region49
    $region48: #{tpu_custom_call.1} parent=1 // pred_region
      _
    $region49: #{tpu_custom_call.1} parent=1 // pred_fallthru
      _
    %357 = vsyncpa [#allocation4], 1
    %358 = vsyncpa [#allocation6], 1

</llo_original>
